<compile_context>
chip_gen: v5e
topology: v5e:2x2
jax: 0.10.0
libtpu: 0.0.40
codegen_flags: <defaults>
</compile_context>

<pallas_src>
import jax
import jax.numpy as jnp
from jax.experimental import pallas as pl
from jax.experimental.pallas import tpu as pltpu

TEMPERATURE = 2.0          # self.T in the PyTorch module
_LOSS_SCALE = 0.1

# ----------------------------------------------------------------------------
# Generation-aware VMEM sizing.
# ----------------------------------------------------------------------------
try:
    _VMEM_CAPACITY = int(getattr(pltpu.get_tpu_info(), "vmem_capacity_bytes",
                                 64 * 1024 * 1024))
except Exception:  # pragma: no cover
    _VMEM_CAPACITY = 64 * 1024 * 1024      # assume the most constrained chip (v7x)

# Use ~3/4 of physical VMEM (capped at 96 MiB), keep headroom for Mosaic scratch.
_VMEM_LIMIT_BYTES = min((_VMEM_CAPACITY * 3) // 4, 96 * 1024 * 1024)
_WORKING_SET_BUDGET = max(8 * 1024 * 1024, _VMEM_LIMIT_BYTES - 8 * 1024 * 1024)


def _round_up(x, m):
    return -(-x // m) * m


def _choose_block_rows(batch, n, in_itemsize):
    """Largest batch tile whose full VMEM working set fits the budget.

    Per-row bytes: 2 inputs x 2 pipeline buffers (input dtype) plus ~6 f32
    (tb, N)-shaped in-kernel temporaries (s, t, e_s, e_t, fused product,
    compiler slack).
    """
    if batch <= 8:
        return batch                      # block == full batch dim; no tail.

    bytes_per_row = 2 * 2 * n * in_itemsize + 6 * n * 4
    rows = int(_WORKING_SET_BUDGET // max(1, bytes_per_row))
    rows = max(8, min(4096, (rows // 8) * 8))

    batch8 = _round_up(batch, 8)
    rows = min(rows, batch8)

    # Keep >= 2 grid steps when the whole batch would otherwise collapse into
    # one tile: the grid axis is "parallel", so both v7x TensorCores get work.
    if rows >= batch8 and batch8 > 8:
        rows = min(rows, max(8, _round_up(-(-batch // 2), 8)))
    return rows


# ----------------------------------------------------------------------------
# Kernels (batch / tile sizes are static -> baked in via closures).
# ----------------------------------------------------------------------------
def _make_classification_kernel(batch, tb):
    inv_t = 1.0 / TEMPERATURE

    def kernel(ys_ref, yt_ref, out_ref):
        row0 = pl.program_id(0) * tb
        row_ids = row0 + jax.lax.broadcasted_iota(jnp.int32, (tb, 1), 0)
        valid = row_ids < batch                                   # (tb, 1)

        # Mask BEFORE exp: the out-of-bounds tail of the last block holds
        # unspecified DMA data and must never reach a transcendental.
        s = jnp.where(valid, ys_ref[...].astype(jnp.float32) * inv_t, 0.0)
        t = jnp.where(valid, yt_ref[...].astype(jnp.float32) * inv_t, 0.0)

        # Student exp / normalizer.
        s_shift = s - jnp.max(s, axis=-1, keepdims=True)
        e_s = jnp.exp(s_shift)
        sum_e_s = jnp.sum(e_s, axis=-1, keepdims=True)            # (tb, 1)

        # Teacher normalizer only.
        t_shift = t - jnp.max(t, axis=-1, keepdims=True)
        sum_e_t = jnp.sum(jnp.exp(t_shift), axis=-1, keepdims=True)

        # Fused:  sum_c p_s*(log_p_s - log_p_t)
        #   = (sum_c e_s*(s_shift - t_shift)) / sum_e_s - log(sum_e_s) + log(sum_e_t)
        cross = jnp.sum(e_s * (s_shift - t_shift), axis=-1, keepdims=True)
        row = (cross * pl.reciprocal(sum_e_s)        # exact (approx=False), once per row
               - jnp.log(sum_e_s) + jnp.log(sum_e_t))
        row = jnp.where(valid, row, 0.0)             # masked rows are provably 0; belt & braces

        out_ref[...] = jnp.full(out_ref.shape, jnp.sum(row), dtype=jnp.float32)

    return kernel


def _make_regression_kernel(batch, tb):
    inv_t = 1.0 / TEMPERATURE

    def kernel(ys_ref, yt_ref, out_ref):
        row0 = pl.program_id(0) * tb
        row_ids = row0 + jax.lax.broadcasted_iota(jnp.int32, (tb, 1), 0)
        valid = row_ids < batch
        s = ys_ref[...].astype(jnp.float32) * inv_t
        t = yt_ref[...].astype(jnp.float32) * inv_t
        d = jnp.where(valid, s - t, 0.0)              # select: garbage never survives
        out_ref[...] = jnp.full(out_ref.shape, jnp.sum(d * d), dtype=jnp.float32)

    return kernel


# ----------------------------------------------------------------------------
# Wrapper
# ----------------------------------------------------------------------------
def rkl_loss(y_s, y_t, mode="classification"):
    """Pallas implementation of RKL.forward. Returns a scalar float32.

    Fast path: pass bf16 logits (cast to f32 in-register inside the kernel).
    """
    assert y_s.shape == y_t.shape, "student/teacher logits must have equal shape"
    n = y_s.shape[-1]
    ys2 = y_s.reshape(-1, n)
    yt2 = y_t.reshape(-1, n)
    batch = ys2.shape[0]

    itemsize = jnp.dtype(ys2.dtype).itemsize
    tb = _choose_block_rows(batch, n, itemsize)
    num_blocks = pl.cdiv(batch, tb)

    if mode == "regression":
        kernel = _make_regression_kernel(batch, tb)
        flops = 3 * batch * n
        transcendentals = 0
    else:
        kernel = _make_classification_kernel(batch, tb)
        flops = 10 * batch * n
        transcendentals = 2 * batch * n          # student + teacher exp

    partials = pl.pallas_call(
        kernel,
        out_shape=jax.ShapeDtypeStruct((num_blocks, 1, 128), jnp.float32),
        grid=(num_blocks,),
        in_specs=[
            pl.BlockSpec((tb, n), lambda i: (i, 0)),
            pl.BlockSpec((tb, n), lambda i: (i, 0)),
        ],
        out_specs=pl.BlockSpec((1, 1, 128), lambda i: (i, 0, 0)),
        compiler_params=pltpu.CompilerParams(
            dimension_semantics=("parallel",),
            vmem_limit_bytes=_VMEM_LIMIT_BYTES,
        ),
        cost_estimate=pl.CostEstimate(
            flops=flops,
            transcendentals=transcendentals,
            bytes_accessed=2 * batch * n * itemsize + num_blocks * 128 * 4,
        ),
    )(ys2, yt2)

    total = jnp.sum(partials[:, 0, 0])
    denom = batch * n if mode == "regression" else batch
    return (jnp.float32(_LOSS_SCALE) / jnp.float32(denom)) * total


def _reference(y_s, y_t, mode="classification"):
    """Pure-JAX reference mirroring the PyTorch forward."""
    t_ = TEMPERATURE
    if mode == "regression":
        d = (y_s / t_).reshape(-1) - (y_t / t_).reshape(-1)
        return 0.1 * jnp.mean(d * d)
    p_s = jax.nn.softmax(y_s / t_, axis=-1)
    p_s1 = jax.nn.log_softmax(y_s / t_, axis=-1)
    p_t = jax.nn.log_softmax(y_t / t_, axis=-1)
    loss = jnp.sum(p_s1 * p_s, axis=-1).mean() - jnp.sum(p_t * p_s, axis=-1).mean()
    return 0.1 * loss


if __name__ == "__main__":
    key = jax.random.PRNGKey(0)
    k1, k2, k3, k4 = jax.random.split(key, 4)

    # Case 1: classification + regression, (B, N) = (8, 128), f32.
    B, N = 8, 128
    y_s = jax.random.normal(k1, (B, N), dtype=jnp.float32)
    y_t = jax.random.normal(k2, (B, N), dtype=jnp.float32)

    out_cls = jax.block_until_ready(rkl_loss(y_s, y_t, mode="classification"))
    ref_cls = _reference(y_s, y_t, mode="classification")
    assert jnp.allclose(out_cls, ref_cls, atol=1e-5, rtol=1e-4), (out_cls, ref_cls)

    out_reg = jax.block_until_ready(rkl_loss(y_s, y_t, mode="regression"))
    ref_reg = _reference(y_s, y_t, mode="regression")
    assert jnp.allclose(out_reg, ref_reg, atol=1e-5, rtol=1e-4), (out_reg, ref_reg)

    # Case 2: leading dims + ragged batch (flatten + in-kernel tail masking,
    # batch=15 rows -> 2 grid steps of 8, last row of block 1 is out-of-bounds).
    y_s2 = jax.random.normal(k3, (3, 5, 160), dtype=jnp.float32)
    y_t2 = jax.random.normal(k4, (3, 5, 160), dtype=jnp.float32)
    out_cls2 = jax.block_until_ready(rkl_loss(y_s2, y_t2, mode="classification"))
    ref_cls2 = _reference(y_s2, y_t2, mode="classification")
    assert jnp.allclose(out_cls2, ref_cls2, atol=1e-5, rtol=1e-4), (out_cls2, ref_cls2)

    # Case 3: bf16 fast path (intended caller contract, halves HBM bytes).
    y_s3 = y_s.astype(jnp.bfloat16)
    y_t3 = y_t.astype(jnp.bfloat16)
    out_bf = jax.block_until_ready(rkl_loss(y_s3, y_t3, mode="classification"))
    ref_bf = _reference(y_s3.astype(jnp.float32), y_t3.astype(jnp.float32),
                        mode="classification")
    assert jnp.allclose(out_bf, ref_bf, atol=1e-5, rtol=1e-4), (out_bf, ref_bf)

    print("KERNEL_OK")
</pallas_src>

<mosaic_0001>
module attributes {stable_mosaic.version = 11 : i64} {
  func.func @kernel(%arg0: i32, %arg1: memref<8x128xf32, #tpu.memory_space<vmem>>, %arg2: memref<8x128xf32, #tpu.memory_space<vmem>>, %arg3: memref<1x1x128xf32, #tpu.memory_space<vmem>>) attributes {dimension_semantics = [#tpu.dimension_semantics<parallel>], iteration_bounds = array<i64: 1>, scalar_prefetch = 0 : i64, scratch_operands = 0 : i64, tpu.core_type = #tpu.core_type<tc>, window_params = [{transform_indices = @transform_0, window_bounds = array<i64: 8, 128>}, {transform_indices = @transform_1, window_bounds = array<i64: 8, 128>}, {transform_indices = @transform_2, window_bounds = array<i64: 1, 1, 128>}]} {
    %c8_i32 = arith.constant 8 : i32
    %0 = arith.muli %arg0, %c8_i32 : i32
    %1 = tpu.iota {dimensions = array<i32: 0>} : vector<8x1xi32>
    %2 = vector.broadcast %0 : i32 to vector<8x1xi32>
    %3 = arith.addi %2, %1 : vector<8x1xi32>
    %c8_i32_0 = arith.constant 8 : i32
    %4 = vector.broadcast %c8_i32_0 : i32 to vector<8x1xi32>
    %5 = arith.cmpi slt, %3, %4 : vector<8x1xi32>
    %c0 = arith.constant 0 : index
    %c0_1 = arith.constant 0 : index
    %6 = vector.load %arg1[%c0, %c0_1] : memref<8x128xf32, #tpu.memory_space<vmem>>, vector<8x128xf32>
    %cst = arith.constant 5.000000e-01 : f32
    %7 = vector.broadcast %cst : f32 to vector<8x128xf32>
    %8 = arith.mulf %6, %7 : vector<8x128xf32>
    %cst_2 = arith.constant 0.000000e+00 : f32
    %9 = vector.shape_cast %5 : vector<8x1xi1> to vector<8x1xi1>
    %10 = vector.broadcast %9 : vector<8x1xi1> to vector<8x128xi1>
    %11 = vector.broadcast %cst_2 : f32 to vector<8x128xf32>
    %12 = arith.select %10, %8, %11 : vector<8x128xi1>, vector<8x128xf32>
    %c0_3 = arith.constant 0 : index
    %c0_4 = arith.constant 0 : index
    %13 = vector.load %arg2[%c0_3, %c0_4] : memref<8x128xf32, #tpu.memory_space<vmem>>, vector<8x128xf32>
    %cst_5 = arith.constant 5.000000e-01 : f32
    %14 = vector.broadcast %cst_5 : f32 to vector<8x128xf32>
    %15 = arith.mulf %13, %14 : vector<8x128xf32>
    %cst_6 = arith.constant 0.000000e+00 : f32
    %16 = vector.shape_cast %5 : vector<8x1xi1> to vector<8x1xi1>
    %17 = vector.broadcast %16 : vector<8x1xi1> to vector<8x128xi1>
    %18 = vector.broadcast %cst_6 : f32 to vector<8x128xf32>
    %19 = arith.select %17, %15, %18 : vector<8x128xi1>, vector<8x128xf32>
    %cst_7 = arith.constant dense<0xFF800000> : vector<8xf32>
    %20 = vector.multi_reduction <maximumf>, %12, %cst_7 [1] : vector<8x128xf32> to vector<8xf32>
    %21 = vector.shape_cast %20 : vector<8xf32> to vector<8x1xf32>
    %22 = vector.broadcast %21 : vector<8x1xf32> to vector<8x128xf32>
    %23 = arith.subf %12, %22 : vector<8x128xf32>
    %24 = math.exp %23 : vector<8x128xf32>
    %cst_8 = arith.constant dense<0.000000e+00> : vector<8xf32>
    %25 = vector.multi_reduction <add>, %24, %cst_8 [1] : vector<8x128xf32> to vector<8xf32>
    %26 = vector.shape_cast %25 : vector<8xf32> to vector<8x1xf32>
    %cst_9 = arith.constant dense<0xFF800000> : vector<8xf32>
    %27 = vector.multi_reduction <maximumf>, %19, %cst_9 [1] : vector<8x128xf32> to vector<8xf32>
    %28 = vector.shape_cast %27 : vector<8xf32> to vector<8x1xf32>
    %29 = vector.broadcast %28 : vector<8x1xf32> to vector<8x128xf32>
    %30 = arith.subf %19, %29 : vector<8x128xf32>
    %31 = math.exp %30 : vector<8x128xf32>
    %cst_10 = arith.constant dense<0.000000e+00> : vector<8xf32>
    %32 = vector.multi_reduction <add>, %31, %cst_10 [1] : vector<8x128xf32> to vector<8xf32>
    %33 = vector.shape_cast %32 : vector<8xf32> to vector<8x1xf32>
    %34 = arith.subf %23, %30 : vector<8x128xf32>
    %35 = arith.mulf %24, %34 : vector<8x128xf32>
    %cst_11 = arith.constant dense<0.000000e+00> : vector<8xf32>
    %36 = vector.multi_reduction <add>, %35, %cst_11 [1] : vector<8x128xf32> to vector<8xf32>
    %37 = vector.shape_cast %36 : vector<8xf32> to vector<8x1xf32>
    %38 = tpu.reciprocal %26 : vector<8x1xf32> -> vector<8x1xf32>
    %39 = arith.mulf %37, %38 : vector<8x1xf32>
    %40 = math.log %26 : vector<8x1xf32>
    %41 = arith.subf %39, %40 : vector<8x1xf32>
    %42 = math.log %33 : vector<8x1xf32>
    %43 = arith.addf %41, %42 : vector<8x1xf32>
    %cst_12 = arith.constant 0.000000e+00 : f32
    %44 = vector.broadcast %cst_12 : f32 to vector<8x1xf32>
    %45 = arith.select %5, %43, %44 : vector<8x1xi1>, vector<8x1xf32>
    %46 = vector.shape_cast %45 : vector<8x1xf32> to vector<1x8x1xf32>
    %cst_13 = arith.constant dense<0.000000e+00> : vector<1xf32>
    %47 = vector.multi_reduction <add>, %46, %cst_13 [1, 2] : vector<1x8x1xf32> to vector<1xf32>
    %48 = vector.shape_cast %47 : vector<1xf32> to vector<1x1x1xf32>
    %49 = vector.extract %48[0, 0, 0] : f32 from vector<1x1x1xf32>
    %50 = vector.broadcast %49 : f32 to vector<1x1x128xf32>
    %c0_14 = arith.constant 0 : index
    %c0_15 = arith.constant 0 : index
    %c0_16 = arith.constant 0 : index
    %51 = vector.load %arg3[%c0_14, %c0_15, %c0_16] : memref<1x1x128xf32, #tpu.memory_space<vmem>>, vector<1x1x128xf32>
    tpu.vector_store %arg3[%c0_14, %c0_15, %c0_16], %50 {strides = array<i32>} : memref<1x1x128xf32, #tpu.memory_space<vmem>>, vector<1x1x128xf32>,
    return
  }
  func.func @transform_0(%arg0: i32) -> (i32, i32) {
    %c0_i32 = arith.constant 0 : i32
    %c0_i32_0 = arith.constant 0 : i32
    return %arg0, %c0_i32 : i32, i32
  }
  func.func @transform_1(%arg0: i32) -> (i32, i32) {
    %c0_i32 = arith.constant 0 : i32
    %c0_i32_0 = arith.constant 0 : i32
    return %arg0, %c0_i32 : i32, i32
  }
  func.func @transform_2(%arg0: i32) -> (i32, i32, i32) {
    %c0_i32 = arith.constant 0 : i32
    %c0_i32_0 = arith.constant 0 : i32
    %c0_i32_1 = arith.constant 0 : i32
    return %arg0, %c0_i32, %c0_i32_0 : i32, i32, i32
  }
}

</mosaic_0001>

<llo_original>
// kernel: tpu_custom_call.1
$region0: #{tpu_custom_call.1}
  #allocation0 [shape = 'u32[]', space=smem, size = 0x4, offset = 0x4, fixed_abs, tag = 'smem constant byte address 0x4 - core index']
  #allocation1 [shape = 'u32[72,128]{1,0:T(1,128)}', space=vmem, size = 0x9000, scoped, tag = 'internal scratch']
  %s0 = inlined_call_operand.hbm [shape: f32[8,128], index: 0, kind: input, shape index: {}]
  %s1 = inlined_call_operand.hbm [shape: f32[8,128], index: 1, kind: input, shape index: {}]
  %s2 = inlined_call_operand.hbm [shape: f32[1,1,128], index: 2, kind: output, shape index: {}]
  %s3 = sld [smem:[#allocation0]]
  $region26: #{tpu_custom_call.1} parent=0
    _
  %s5 = ssub.s32 1, %s3
  %s6 = scalar_select 0, %s5, %s3
  $region1: #{tpu_custom_call.1} parent=0
    #allocation2 [shape = 'u8[4096]{0}', space=vmem, size = 0x1000, scoped, tag = 'input window, operand 0, single buffered']
    #allocation3 [shape = 's32[1]{0}', space=sflag, size = 0x4, scoped, tag = 'scoped memory for tpu_custom_call.1']
    #allocation4 [shape = 's32[1]{0}', space=sflag, size = 0x4, scoped, tag = 'scoped memory for tpu_custom_call.1']
    #allocation5 [shape = 'u8[4096]{0}', space=vmem, size = 0x1000, scoped, tag = 'input window, operand 1, single buffered']
    #allocation6 [shape = 's32[1]{0}', space=sflag, size = 0x4, scoped, tag = 'scoped memory for tpu_custom_call.1']
    #allocation7 [shape = 'u8[512]{0}', space=vmem, size = 0x400, scoped, tag = 'output window, operand 0, single buffered']
    %7 = vsyncpa [#allocation3], 0
    %8 = vsyncpa [#allocation6], 0
    %9 = vsyncpa [#allocation4], 0
    // Predicated region
    $region2: #{tpu_custom_call.1} parent=1 // pred_check
      _
    $region3: #{tpu_custom_call.1} parent=1 // pred_check_branch
      %11 = sbr.rel (0) target = $region5
    $region4: #{tpu_custom_call.1} parent=1 // pred_region
      %13 = vsyncadd [#allocation3], 0
      %s15 = sshll.u32 %s0, 4
      %s16 = int_to_ptr.hbm [resolvable:$true] %s15
      %s17 = sshll.u32 [#allocation2], 4
      %s18 = int_to_ptr.vmem [resolvable:$true] %s17
      %20 = dma.hbm_to_vmem [thread:$0]  %s16, 128, %s18, [#allocation3]
    $region5: #{tpu_custom_call.1} parent=1 // pred_fallthru
      _
    // Predicated region
    $region6: #{tpu_custom_call.1} parent=1 // pred_check
      _
    $region7: #{tpu_custom_call.1} parent=1 // pred_check_branch
      %22 = sbr.rel (0) target = $region9
    $region8: #{tpu_custom_call.1} parent=1 // pred_region
      %24 = vsyncadd [#allocation6], 0
      %s26 = sshll.u32 %s1, 4
      %s27 = int_to_ptr.hbm [resolvable:$true] %s26
      %s28 = sshll.u32 [#allocation5], 4
      %s29 = int_to_ptr.vmem [resolvable:$true] %s28
      %31 = dma.hbm_to_vmem [thread:$0]  %s27, 128, %s29, [#allocation6]
    $region9: #{tpu_custom_call.1} parent=1 // pred_fallthru
      _
    // Predicated region
    $region10: #{tpu_custom_call.1} parent=1 // pred_check
      _
    $region11: #{tpu_custom_call.1} parent=1 // pred_check_branch
      %33 = sbr.rel (0) target = $region13
    $region12: #{tpu_custom_call.1} parent=1 // pred_region
      %35 = dma.done [#allocation3], 128
    $region13: #{tpu_custom_call.1} parent=1 // pred_fallthru
      _
    // Predicated region
    $region14: #{tpu_custom_call.1} parent=1 // pred_check
      _
    $region15: #{tpu_custom_call.1} parent=1 // pred_check_branch
      %37 = sbr.rel (0) target = $region17
    $region16: #{tpu_custom_call.1} parent=1 // pred_region
      %39 = dma.done [#allocation6], 128
    $region17: #{tpu_custom_call.1} parent=1 // pred_fallthru
      _
    %s40 = smul.u32 0, 8
    %v41 = vlaneseq
    %v42 = vshrl.u32 %v41, 7
    %v43 = vstv %s40
    %v44 = vadd.s32 %v43, %v42
    %vm45 = vcmp.lt.s32.totalorder %v44, 8
    %v46 = vld [vmem:[#allocation2] sm:$0xff]
    %v47 = vmul.f32 %v46, 0.5
    %v48 = vsel %vm45, 1, 0
    %vm49 = vcmp.eq.s32.totalorder %v48, 1
    %v50 = vsel %vm49, %v47, 0.0
    %v51 = vld [vmem:[#allocation5] sm:$0xff]
    %v52 = vmul.f32 %v51, 0.5
    %v53 = vsel %vm49, %v52, 0.0
    %54 = vmax.xlane.f32.xlu0 %v50
    %v55 = vpop.xlane.xlu0 %54
    %v56 = vsub.f32 %v50, %v55
    %v57 = vmul.f32 %v56, 1.442695
    %v58 = vpow.pop %v57
    %59 = vadd.xlane.f32.xlu0 %v58
    %v60 = vpop.xlane.xlu0 %59
    %61 = vmax.xlane.f32.xlu0 %v53
    %v62 = vpop.xlane.xlu0 %61
    %v63 = vsub.f32 %v53, %v62
    %v64 = vmul.f32 %v63, 1.442695
    %v65 = vpow.pop %v64
    %66 = vadd.xlane.f32.xlu0 %v65
    %v67 = vpop.xlane.xlu0 %66
    %v68 = vsub.f32 %v56, %v63
    %v69 = vmul.f32 %v58, %v68
    %70 = vadd.xlane.f32.xlu0 %v69
    %v71 = vpop.xlane.xlu0 %70
    %v72 = vrcp.pop %v60
    %v73 = vmul.f32 %v60, %v72
    %v74 = vsub.f32 1.0, %v73
    %v75 = vmul.f32 %v72, %v74
    %v76 = vadd.f32 %v72, %v75
    %vm77 = vweird.f32 %v60
    %vm78 = vweird.f32 %v72
    %vm79 = vmor %vm77, %vm78
    %v80 = vsel %vm79, %v72, %v76
    %v81 = vand.u32 2147483647, %v60
    %vm82 = vcmp.eq.f32.partialorder %v81, 8.507059e+37
    %v83 = vand.u32 %v60, 2147483648
    %v84 = vor.u32 1.1754944e-38, %v83
    %v85 = vsel %vm82, %v84, %v80
    %v86 = vmul.f32 %v71, %v85
    %v87 = vlog2.pop %v60
    %v88 = vmul.f32 %v87, 0.6931472
    %v89 = vsub.f32 %v86, %v88
    %v90 = vlog2.pop %v67
    %v91 = vmul.f32 %v90, 0.6931472
    %v92 = vadd.f32 %v89, %v91
    %v93 = vsel %vm45, %v92, 0.0
    %vm94 = vcmask 7168
    %v95 = vsel %vm94, %v93, 0.0
    %96 = vadd.xlane.f32.xlu0 %v95
    %v97 = vpop.xlane.xlu0 %96
    %v98 = vrot.slane %v97, 4
    %v99 = vadd.f32 %v97, %v98
    %v100 = vrot.slane %v99, 2
    %v101 = vadd.f32 %v99, %v100
    %v102 = vrot.slane %v101, 1
    %v103 = vadd.f32 %v101, %v102
    %s104 = vtos %v103
    %v105 = vstv %s104
    %106 = vst [vmem:[#allocation7] sm:$0x1] %v105
    // Predicated region
    $region18: #{tpu_custom_call.1} parent=1 // pred_check
      _
    $region19: #{tpu_custom_call.1} parent=1 // pred_check_branch
      %108 = sbr.rel (0) target = $region21
    $region20: #{tpu_custom_call.1} parent=1 // pred_region
      %110 = vsyncadd [#allocation4], 0
      %s112 = sshll.u32 [#allocation7], 4
      %s113 = int_to_ptr.vmem [resolvable:$true] %s112
      %s114 = sshll.u32 %s2, 4
      %s115 = int_to_ptr.hbm [resolvable:$true] %s114
      %117 = dma.vmem_to_hbm [thread:$0]  %s113, 16, %s115, [#allocation4]
    $region21: #{tpu_custom_call.1} parent=1 // pred_fallthru
      _
    // Predicated region
    $region22: #{tpu_custom_call.1} parent=1 // pred_check
      _
    $region23: #{tpu_custom_call.1} parent=1 // pred_check_branch
      %119 = sbr.rel (0) target = $region25
    $region24: #{tpu_custom_call.1} parent=1 // pred_region
      %121 = dma.done [#allocation4], 16
    $region25: #{tpu_custom_call.1} parent=1 // pred_fallthru
      _
    %122 = vsyncpa [#allocation3], 1
    %123 = vsyncpa [#allocation6], 1
    %124 = vsyncpa [#allocation4], 1

</llo_original>
